<compile_context>
chip_gen: v6e
topology: v6e:2x2x1
jax: 0.10.0
libtpu: 0.0.40
codegen_flags: <defaults>
</compile_context>

<pallas_src>
import functools

import jax
import jax.numpy as jnp
import numpy as np
from jax import lax
from jax.experimental import pallas as pl
from jax.experimental.pallas import tpu as pltpu

FEATURE_DIM = 384
HIDDEN = (256, 128, 64, 1)


# ----------------------------------------------------------------------------
# Kernel
# ----------------------------------------------------------------------------
def _mlp_kernel(x_ref,
                w1_ref, b1_ref,
                w2_ref, b2_ref,
                w3_ref, b3_ref,
                w4_ref, b4_ref,
                o_ref):
    # Layer 1: (TM, 384) @ (384, 256) + (1, 256) -> ReLU   (bf16 MXU, f32 acc)
    x = x_ref[...].astype(jnp.bfloat16)   # no-op if x already arrives as bf16
    h = jnp.dot(x, w1_ref[...], preferred_element_type=jnp.float32)
    h = jnp.maximum(h + b1_ref[...], 0.0)
    # Layer 2: (TM, 256) @ (256, 128) + (1, 128) -> ReLU
    h = jnp.dot(h.astype(jnp.bfloat16), w2_ref[...],
                preferred_element_type=jnp.float32)
    h = jnp.maximum(h + b2_ref[...], 0.0)
    # Layer 3: (TM, 128) @ (128, 64) + (1, 64) -> ReLU
    h = jnp.dot(h.astype(jnp.bfloat16), w3_ref[...],
                preferred_element_type=jnp.float32)
    h = jnp.maximum(h + b3_ref[...], 0.0)
    # Layer 4 (out_features == 1): contract the 64-dim of (1, 64) against the
    # 64-dim of (TM, 64) -> (1, TM).  Result is lane-dense, so the store uses
    # full 128-lane vst's instead of one masked lane per row.  Kept in f32
    # (tiny matmul; closest to the module numerics).
    row = lax.dot_general(w4_ref[...], h,
                          dimension_numbers=(((1,), (1,)), ((), ())),
                          preferred_element_type=jnp.float32)      # (1, TM)
    row = jnp.maximum(row + b4_ref[...], 0.0)                      # final F.relu
    o_ref[...] = row.reshape(o_ref.shape).astype(o_ref.dtype)      # (1, 1, TM)


# ----------------------------------------------------------------------------
# Wrapper
# ----------------------------------------------------------------------------
def _round_up(x, m):
    return (x + m - 1) // m * m


@functools.lru_cache(maxsize=1)
def _num_tensorcores():
    """Best-effort TensorCore-per-device count (for grid-sharding decisions).

    Falls back to 1 (the safe single-TC code path, correct on v5e/v6e)."""
    try:
        kind = jax.devices()[0].device_kind.lower()
        # v7x (2 TC/chip) and megacore chips: dimension_semantics=("parallel",)
        # shards the batch grid across cores, so splitting small batches helps.
        if "v7" in kind or "7x" in kind or "v4" in kind or "v5p" in kind:
            return 2
    except Exception:
        pass
    try:
        info = pltpu.get_tpu_info()
        for attr in ("num_cores", "num_tensorcores", "tensorcore_count",
                     "cores_per_chip"):
            v = getattr(info, attr, None)
            if isinstance(v, int) and v > 0:
                return v
    except Exception:
        pass
    return 1


def _pick_tile(batch, tile_m, num_tc):
    """Batch tile: as large as requested.  On multi-TC chips split small
    batches so both cores get a grid step; on single-TC chips one tile covers
    the whole (small) batch.  Multiple of 16 for bf16 sublane packing."""
    if num_tc > 1:
        per_core = -(-batch // num_tc)          # ceil(batch / num_tc)
        return max(16, min(tile_m, _round_up(per_core, 16)))
    return max(16, min(tile_m, _round_up(batch, 16)))


@functools.partial(jax.jit, static_argnames=("tile_m",))
def generator_forward(x, params, tile_m=1024):
    """x: (B, FEATURE_DIM) float32 or bfloat16 -> (B, 1) float32."""
    (w1, b1), (w2, b2), (w3, b3), (w4, b4) = params
    B, D = x.shape
    assert D == FEATURE_DIM

    tile = _pick_tile(B, tile_m, _num_tensorcores())
    n_tiles = -(-B // tile)
    grid = (n_tiles,)

    # Weights for layers 1-3 in bf16 (MXU fast path); biases stay f32 and are
    # added on the f32 accumulator.  Layer-4 weight becomes a (1, 64) f32 row.
    # x is passed through at its incoming dtype (bf16 producers halve the
    # dominant HBM stream); the in-kernel cast handles either dtype.
    bf16 = jnp.bfloat16
    w1b, w2b, w3b = w1.astype(bf16), w2.astype(bf16), w3.astype(bf16)
    w4r = w4.reshape(1, HIDDEN[2]).astype(jnp.float32)

    const = lambda i: (0, 0)  # weights / biases: same whole block every step

    weight_args = (w1b, b1, w2b, b2, w3b, b3, w4r, b4)
    weight_bytes = sum(int(np.prod(a.shape)) * a.dtype.itemsize
                       for a in weight_args)

    # Advisory cost estimate for XLA's scheduler around the custom call.
    padded_b = n_tiles * tile
    flops = 2 * padded_b * (D * 256 + 256 * 128 + 128 * 64 + 64 * 1)
    bytes_accessed = (B * D * x.dtype.itemsize          # x stream
                      + padded_b * 4                    # output rows
                      + weight_bytes)
    cost = pl.CostEstimate(flops=flops, transcendentals=0,
                           bytes_accessed=bytes_accessed)

    # Per-step VMEM footprint (double-buffered x / out + resident weights +
    # f32 intermediates).  Only override the scoped-VMEM default when the
    # budget actually approaches it (very large tiles).
    step_bytes = (2 * tile * D * x.dtype.itemsize       # x, double-buffered
                  + 2 * tile * 4                        # out, double-buffered
                  + weight_bytes
                  + 2 * tile * (256 + 128 + 64) * 4)    # f32 intermediates
    cp_kwargs = dict(dimension_semantics=("parallel",))
    if step_bytes + (4 << 20) > (30 << 20):
        cp_kwargs["vmem_limit_bytes"] = int(min(step_bytes + (8 << 20), 60 << 20))

    out = pl.pallas_call(
        _mlp_kernel,
        out_shape=jax.ShapeDtypeStruct((n_tiles, 1, tile), jnp.float32),
        grid_spec=pltpu.PrefetchScalarGridSpec(
            num_scalar_prefetch=0,
            grid=grid,
            in_specs=[
                pl.BlockSpec((tile, D), lambda i: (i, 0)),          # x tile
                pl.BlockSpec(w1b.shape, const), pl.BlockSpec(b1.shape, const),
                pl.BlockSpec(w2b.shape, const), pl.BlockSpec(b2.shape, const),
                pl.BlockSpec(w3b.shape, const), pl.BlockSpec(b3.shape, const),
                pl.BlockSpec(w4r.shape, const), pl.BlockSpec(b4.shape, const),
            ],
            out_specs=pl.BlockSpec((1, 1, tile), lambda i: (i, 0, 0)),
        ),
        compiler_params=pltpu.CompilerParams(**cp_kwargs),
        cost_estimate=cost,
    )(x, *weight_args)

    # (n_tiles, 1, tile) -> flat row order i*tile + j -> slice valid rows.
    # NOTE: the tail rows of the last tile are garbage (partial input block);
    # they must be sliced off here before any reduction over the output.
    return out.reshape(-1)[:B].reshape(B, 1)


# ----------------------------------------------------------------------------
# Parameters + references
# ----------------------------------------------------------------------------
def init_params(key, feature_dim=FEATURE_DIM):
    """Deterministic synthetic init. Weights stored as (in, out); bias (1, out)."""
    dims = (feature_dim,) + HIDDEN
    params = []
    for li in range(len(HIDDEN)):
        key, kw, kb = jax.random.split(key, 3)
        fan_in, fan_out = dims[li], dims[li + 1]
        bound = 1.0 / np.sqrt(fan_in)
        w = jax.random.uniform(kw, (fan_in, fan_out), jnp.float32, -bound, bound)
        b = jax.random.uniform(kb, (1, fan_out), jnp.float32, -bound, bound)
        params.append((w, b))
    return params


def reference_forward_bf16(x, params):
    """Mirrors the kernel numerics: bf16 matmul inputs for layers 1-3 with f32
    accumulation; bias/ReLU in f32; final (64->1) layer in f32."""
    (w1, b1), (w2, b2), (w3, b3), (w4, b4) = params
    h = x
    for w, b in ((w1, b1), (w2, b2), (w3, b3)):
        h = jnp.dot(h.astype(jnp.bfloat16), w.astype(jnp.bfloat16),
                    preferred_element_type=jnp.float32)
        h = jnp.maximum(h + b, 0.0)
    h = jnp.dot(h, w4, preferred_element_type=jnp.float32) + b4
    return jnp.maximum(h, 0.0)


def reference_forward_f32(x, params):
    """Pure f32 reference (PyTorch module semantics)."""
    h = x.astype(jnp.float32)
    for w, b in params:
        h = jnp.maximum(jnp.dot(h, w) + b, 0.0)
    return h


# ----------------------------------------------------------------------------
# Demo / self-test
# ----------------------------------------------------------------------------
if __name__ == "__main__":
    key = jax.random.PRNGKey(0)
    kx, kp = jax.random.split(key)
    params = init_params(kp)

    # Small shapes: one batch inside a single (partial) tile, one ragged batch
    # exercising the cdiv grid + partial last input block, and one bf16-input
    # batch exercising the halved x HBM stream.
    cases = [(8, jnp.float32), (50, jnp.float32), (50, jnp.bfloat16)]
    for batch, in_dtype in cases:
        kx, kb = jax.random.split(kx)
        x = jax.random.normal(kb, (batch, FEATURE_DIM), jnp.float32)
        x_in = x.astype(in_dtype)

        out = jax.block_until_ready(generator_forward(x_in, params))
        assert out.shape == (batch, 1), out.shape

        ref = reference_forward_bf16(x_in, params)
        np.testing.assert_allclose(np.asarray(out), np.asarray(ref),
                                   rtol=2e-3, atol=2e-3)
        ref32 = reference_forward_f32(x, params)
        np.testing.assert_allclose(np.asarray(out), np.asarray(ref32),
                                   rtol=1e-1, atol=1e-1)

    print("KERNEL_OK")
</pallas_src>

<mosaic_0001>
module attributes {stable_mosaic.version = 11 : i64} {
  func.func @_mlp_kernel(%arg0: i32, %arg1: memref<16x384xf32, #tpu.memory_space<vmem>>, %arg2: memref<384x256xbf16, #tpu.memory_space<vmem>>, %arg3: memref<1x256xf32, #tpu.memory_space<vmem>>, %arg4: memref<256x128xbf16, #tpu.memory_space<vmem>>, %arg5: memref<1x128xf32, #tpu.memory_space<vmem>>, %arg6: memref<128x64xbf16, #tpu.memory_space<vmem>>, %arg7: memref<1x64xf32, #tpu.memory_space<vmem>>, %arg8: memref<1x64xf32, #tpu.memory_space<vmem>>, %arg9: memref<1x1xf32, #tpu.memory_space<vmem>>, %arg10: memref<1x1x16xf32, #tpu.memory_space<vmem>>) attributes {dimension_semantics = [#tpu.dimension_semantics<parallel>], iteration_bounds = array<i64: 1>, scalar_prefetch = 0 : i64, scratch_operands = 0 : i64, tpu.core_type = #tpu.core_type<tc>, window_params = [{transform_indices = @transform_0, window_bounds = array<i64: 16, 384>}, {pipeline_mode = #tpu.pipeline_mode<synchronous>, transform_indices = @transform_1, window_bounds = array<i64: 384, 256>}, {pipeline_mode = #tpu.pipeline_mode<synchronous>, transform_indices = @transform_2, window_bounds = array<i64: 1, 256>}, {pipeline_mode = #tpu.pipeline_mode<synchronous>, transform_indices = @transform_3, window_bounds = array<i64: 256, 128>}, {pipeline_mode = #tpu.pipeline_mode<synchronous>, transform_indices = @transform_4, window_bounds = array<i64: 1, 128>}, {pipeline_mode = #tpu.pipeline_mode<synchronous>, transform_indices = @transform_5, window_bounds = array<i64: 128, 64>}, {pipeline_mode = #tpu.pipeline_mode<synchronous>, transform_indices = @transform_6, window_bounds = array<i64: 1, 64>}, {pipeline_mode = #tpu.pipeline_mode<synchronous>, transform_indices = @transform_7, window_bounds = array<i64: 1, 64>}, {pipeline_mode = #tpu.pipeline_mode<synchronous>, transform_indices = @transform_8, window_bounds = array<i64: 1, 1>}, {transform_indices = @transform_9, window_bounds = array<i64: 1, 1, 16>}]} {
    %c0 = arith.constant 0 : index
    %c0_0 = arith.constant 0 : index
    %0 = vector.load %arg1[%c0, %c0_0] : memref<16x384xf32, #tpu.memory_space<vmem>>, vector<16x384xf32>
    %1 = arith.truncf %0 : vector<16x384xf32> to vector<16x384xbf16>
    %c0_1 = arith.constant 0 : index
    %c0_2 = arith.constant 0 : index
    %2 = vector.load %arg2[%c0_1, %c0_2] : memref<384x256xbf16, #tpu.memory_space<vmem>>, vector<384x256xbf16>
    %cst = arith.constant dense<0.000000e+00> : vector<16x256xf32>
    %3 = tpu.matmul %1, %2, %cst {dimension_numbers = #tpu.dot_dimension_numbers<[1], [0], [0], [1], [0, 0, 1, 1], [], []>} : vector<16x384xbf16>, vector<384x256xbf16>, vector<16x256xf32> -> vector<16x256xf32>
    %c0_3 = arith.constant 0 : index
    %c0_4 = arith.constant 0 : index
    %4 = vector.load %arg3[%c0_3, %c0_4] : memref<1x256xf32, #tpu.memory_space<vmem>>, vector<1x256xf32>
    %5 = vector.broadcast %4 : vector<1x256xf32> to vector<16x256xf32>
    %6 = arith.addf %3, %5 : vector<16x256xf32>
    %cst_5 = arith.constant 0.000000e+00 : f32
    %7 = vector.broadcast %cst_5 : f32 to vector<16x256xf32>
    %8 = arith.maximumf %6, %7 : vector<16x256xf32>
    %9 = arith.truncf %8 : vector<16x256xf32> to vector<16x256xbf16>
    %c0_6 = arith.constant 0 : index
    %c0_7 = arith.constant 0 : index
    %10 = vector.load %arg4[%c0_6, %c0_7] : memref<256x128xbf16, #tpu.memory_space<vmem>>, vector<256x128xbf16>
    %cst_8 = arith.constant dense<0.000000e+00> : vector<16x128xf32>
    %11 = tpu.matmul %9, %10, %cst_8 {dimension_numbers = #tpu.dot_dimension_numbers<[1], [0], [0], [1], [0, 0, 1, 1], [], []>} : vector<16x256xbf16>, vector<256x128xbf16>, vector<16x128xf32> -> vector<16x128xf32>
    %c0_9 = arith.constant 0 : index
    %c0_10 = arith.constant 0 : index
    %12 = vector.load %arg5[%c0_9, %c0_10] : memref<1x128xf32, #tpu.memory_space<vmem>>, vector<1x128xf32>
    %13 = vector.broadcast %12 : vector<1x128xf32> to vector<16x128xf32>
    %14 = arith.addf %11, %13 : vector<16x128xf32>
    %cst_11 = arith.constant 0.000000e+00 : f32
    %15 = vector.broadcast %cst_11 : f32 to vector<16x128xf32>
    %16 = arith.maximumf %14, %15 : vector<16x128xf32>
    %17 = arith.truncf %16 : vector<16x128xf32> to vector<16x128xbf16>
    %c0_12 = arith.constant 0 : index
    %c0_13 = arith.constant 0 : index
    %18 = vector.load %arg6[%c0_12, %c0_13] : memref<128x64xbf16, #tpu.memory_space<vmem>>, vector<128x64xbf16>
    %cst_14 = arith.constant dense<0.000000e+00> : vector<16x64xf32>
    %19 = tpu.matmul %17, %18, %cst_14 {dimension_numbers = #tpu.dot_dimension_numbers<[1], [0], [0], [1], [0, 0, 1, 1], [], []>} : vector<16x128xbf16>, vector<128x64xbf16>, vector<16x64xf32> -> vector<16x64xf32>
    %c0_15 = arith.constant 0 : index
    %c0_16 = arith.constant 0 : index
    %20 = vector.load %arg7[%c0_15, %c0_16] : memref<1x64xf32, #tpu.memory_space<vmem>>, vector<1x64xf32>
    %21 = vector.broadcast %20 : vector<1x64xf32> to vector<16x64xf32>
    %22 = arith.addf %19, %21 : vector<16x64xf32>
    %cst_17 = arith.constant 0.000000e+00 : f32
    %23 = vector.broadcast %cst_17 : f32 to vector<16x64xf32>
    %24 = arith.maximumf %22, %23 : vector<16x64xf32>
    %c0_18 = arith.constant 0 : index
    %c0_19 = arith.constant 0 : index
    %25 = vector.load %arg8[%c0_18, %c0_19] : memref<1x64xf32, #tpu.memory_space<vmem>>, vector<1x64xf32>
    %cst_20 = arith.constant dense<0.000000e+00> : vector<1x16xf32>
    %26 = tpu.matmul %25, %24, %cst_20 {dimension_numbers = #tpu.dot_dimension_numbers<[1], [1], [0], [0], [0, 0, 1, 0], [], []>} : vector<1x64xf32>, vector<16x64xf32>, vector<1x16xf32> -> vector<1x16xf32>
    %c0_21 = arith.constant 0 : index
    %c0_22 = arith.constant 0 : index
    %27 = vector.load %arg9[%c0_21, %c0_22] : memref<1x1xf32, #tpu.memory_space<vmem>>, vector<1x1xf32>
    %28 = vector.broadcast %27 : vector<1x1xf32> to vector<1x16xf32>
    %29 = arith.addf %26, %28 : vector<1x16xf32>
    %cst_23 = arith.constant 0.000000e+00 : f32
    %30 = vector.broadcast %cst_23 : f32 to vector<1x16xf32>
    %31 = arith.maximumf %29, %30 : vector<1x16xf32>
    %32 = vector.shape_cast %31 : vector<1x16xf32> to vector<1x1x16xf32>
    %c0_24 = arith.constant 0 : index
    %c0_25 = arith.constant 0 : index
    %c0_26 = arith.constant 0 : index
    %33 = vector.load %arg10[%c0_24, %c0_25, %c0_26] : memref<1x1x16xf32, #tpu.memory_space<vmem>>, vector<1x1x16xf32>
    tpu.vector_store %arg10[%c0_24, %c0_25, %c0_26], %32 {strides = array<i32>} : memref<1x1x16xf32, #tpu.memory_space<vmem>>, vector<1x1x16xf32>,
    return
  }
  func.func @transform_0(%arg0: i32) -> (i32, i32) {
    %c0_i32 = arith.constant 0 : i32
    %c0_i32_0 = arith.constant 0 : i32
    return %arg0, %c0_i32 : i32, i32
  }
  func.func @transform_1(%arg0: i32) -> (i32, i32) {
    %c0_i32 = arith.constant 0 : i32
    %c0_i32_0 = arith.constant 0 : i32
    %c0_i32_1 = arith.constant 0 : i32
    return %c0_i32, %c0_i32_0 : i32, i32
  }
  func.func @transform_2(%arg0: i32) -> (i32, i32) {
    %c0_i32 = arith.constant 0 : i32
    %c0_i32_0 = arith.constant 0 : i32
    %c0_i32_1 = arith.constant 0 : i32
    return %c0_i32, %c0_i32_0 : i32, i32
  }
  func.func @transform_3(%arg0: i32) -> (i32, i32) {
    %c0_i32 = arith.constant 0 : i32
    %c0_i32_0 = arith.constant 0 : i32
    %c0_i32_1 = arith.constant 0 : i32
    return %c0_i32, %c0_i32_0 : i32, i32
  }
  func.func @transform_4(%arg0: i32) -> (i32, i32) {
    %c0_i32 = arith.constant 0 : i32
    %c0_i32_0 = arith.constant 0 : i32
    %c0_i32_1 = arith.constant 0 : i32
    return %c0_i32, %c0_i32_0 : i32, i32
  }
  func.func @transform_5(%arg0: i32) -> (i32, i32) {
    %c0_i32 = arith.constant 0 : i32
    %c0_i32_0 = arith.constant 0 : i32
    %c0_i32_1 = arith.constant 0 : i32
    return %c0_i32, %c0_i32_0 : i32, i32
  }
  func.func @transform_6(%arg0: i32) -> (i32, i32) {
    %c0_i32 = arith.constant 0 : i32
    %c0_i32_0 = arith.constant 0 : i32
    %c0_i32_1 = arith.constant 0 : i32
    return %c0_i32, %c0_i32_0 : i32, i32
  }
  func.func @transform_7(%arg0: i32) -> (i32, i32) {
    %c0_i32 = arith.constant 0 : i32
    %c0_i32_0 = arith.constant 0 : i32
    %c0_i32_1 = arith.constant 0 : i32
    return %c0_i32, %c0_i32_0 : i32, i32
  }
  func.func @transform_8(%arg0: i32) -> (i32, i32) {
    %c0_i32 = arith.constant 0 : i32
    %c0_i32_0 = arith.constant 0 : i32
    %c0_i32_1 = arith.constant 0 : i32
    return %c0_i32, %c0_i32_0 : i32, i32
  }
  func.func @transform_9(%arg0: i32) -> (i32, i32, i32) {
    %c0_i32 = arith.constant 0 : i32
    %c0_i32_0 = arith.constant 0 : i32
    %c0_i32_1 = arith.constant 0 : i32
    return %arg0, %c0_i32, %c0_i32_0 : i32, i32, i32
  }
}

</mosaic_0001>

<llo_original>
// kernel: generator_forward.1
$region0: #{generator_forward.1}
  #allocation0 [shape = 'u32[]', space=smem, size = 0x4, offset = 0x4, fixed_abs, tag = 'smem constant byte address 0x4 - core index']
  #allocation1 [shape = 'u32[144,128]{1,0:T(1,128)}', space=vmem, size = 0x12000, scoped, tag = 'internal scratch']
  #allocation2 [shape = 'f32[1,1]{1,0:T(1,128)S(1)}', space=vmem, size = 0x200, scoped, tag = 'scoped memory for generator_forward.1']
  %s0 = inlined_call_operand.vmem [shape: f32[8,384], index: 0, kind: input, shape index: {}]
  %s1 = inlined_call_operand.vmem [shape: bf16[384,256], index: 1, kind: input, shape index: {}]
  %s2 = inlined_call_operand.vmem [shape: f32[1,256], index: 2, kind: input, shape index: {}]
  %s3 = inlined_call_operand.vmem [shape: bf16[256,128], index: 3, kind: input, shape index: {}]
  %s4 = inlined_call_operand.vmem [shape: f32[1,128], index: 4, kind: input, shape index: {}]
  %s5 = inlined_call_operand.vmem [shape: bf16[128,64], index: 5, kind: input, shape index: {}]
  %s6 = inlined_call_operand.vmem [shape: f32[1,64], index: 6, kind: input, shape index: {}]
  %s7 = inlined_call_operand.vmem [shape: f32[1,64], index: 7, kind: input, shape index: {}]
  %s8 = inlined_call_operand.<no memory space> [shape: f32[1,1], index: 8, kind: input, shape index: {}]
  %s9 = inlined_call_operand.vmem [shape: f32[1,1,16], index: 9, kind: output, shape index: {}]
  %s10 = sld [smem:[#allocation0]]
  $region46: #{generator_forward.1} parent=0
    _
  %s12 = ssub.s32 1, %s10
  %s13 = scalar_select 0, %s12, %s10
  %v14 = vstv %s8
  %15 = vst [vmem:[#allocation2] sm:$0x1] %v14
  // Predicated region
  $region2: #{generator_forward.1} parent=0 // pred_check
    _
  $region3: #{generator_forward.1} parent=0 // pred_check_branch
    %17 = sbr.rel (0) target = $region5
  $region4: #{generator_forward.1} parent=0 // pred_region
    _
  $region5: #{generator_forward.1} parent=0 // pred_fallthru
    _
  // Predicated region
  $region6: #{generator_forward.1} parent=0 // pred_check
    _
  $region7: #{generator_forward.1} parent=0 // pred_check_branch
    %19 = sbr.rel (0) target = $region9
  $region8: #{generator_forward.1} parent=0 // pred_region
    _
  $region9: #{generator_forward.1} parent=0 // pred_fallthru
    _
  // Predicated region
  $region10: #{generator_forward.1} parent=0 // pred_check
    _
  $region11: #{generator_forward.1} parent=0 // pred_check_branch
    %21 = sbr.rel (0) target = $region13
  $region12: #{generator_forward.1} parent=0 // pred_region
    _
  $region13: #{generator_forward.1} parent=0 // pred_fallthru
    _
  // Predicated region
  $region14: #{generator_forward.1} parent=0 // pred_check
    _
  $region15: #{generator_forward.1} parent=0 // pred_check_branch
    %23 = sbr.rel (0) target = $region17
  $region16: #{generator_forward.1} parent=0 // pred_region
    _
  $region17: #{generator_forward.1} parent=0 // pred_fallthru
    _
  // Predicated region
  $region18: #{generator_forward.1} parent=0 // pred_check
    _
  $region19: #{generator_forward.1} parent=0 // pred_check_branch
    %25 = sbr.rel (0) target = $region21
  $region20: #{generator_forward.1} parent=0 // pred_region
    _
  $region21: #{generator_forward.1} parent=0 // pred_fallthru
    _
  // Predicated region
  $region22: #{generator_forward.1} parent=0 // pred_check
    _
  $region23: #{generator_forward.1} parent=0 // pred_check_branch
    %27 = sbr.rel (0) target = $region25
  $region24: #{generator_forward.1} parent=0 // pred_region
    _
  $region25: #{generator_forward.1} parent=0 // pred_fallthru
    _
  // Predicated region
  $region26: #{generator_forward.1} parent=0 // pred_check
    _
  $region27: #{generator_forward.1} parent=0 // pred_check_branch
    %29 = sbr.rel (0) target = $region29
  $region28: #{generator_forward.1} parent=0 // pred_region
    _
  $region29: #{generator_forward.1} parent=0 // pred_fallthru
    _
  // Predicated region
  $region30: #{generator_forward.1} parent=0 // pred_check
    _
  $region31: #{generator_forward.1} parent=0 // pred_check_branch
    %31 = sbr.rel (0) target = $region33
  $region32: #{generator_forward.1} parent=0 // pred_region
    _
  $region33: #{generator_forward.1} parent=0 // pred_fallthru
    _
  // Predicated region
  $region34: #{generator_forward.1} parent=0 // pred_check
    _
  $region35: #{generator_forward.1} parent=0 // pred_check_branch
    %33 = sbr.rel (0) target = $region37
  $region36: #{generator_forward.1} parent=0 // pred_region
    _
  $region37: #{generator_forward.1} parent=0 // pred_fallthru
    _
  %v35 = vld [vmem:[%s0] sm:$0xff]
  %v36 = vld [vmem:[%s0 + $0x8] sm:$0xff]
  %v37 = vld [vmem:[%s0 + $0x10] sm:$0xff]
  %v38 = vld [vmem:[%s0 + $0x18] sm:$0xff]
  %v39 = vld [vmem:[%s0 + $0x20] sm:$0xff]
  %v40 = vld [vmem:[%s0 + $0x28] sm:$0xff]
  %v41 = vpack.c.bf16 %v38, %v35
  %v42 = vpack.c.bf16 %v39, %v36
  %v43 = vpack.c.bf16 %v40, %v37
  %v44 = vld [vmem:[%s1] sm:$0xff]
  %v45 = vld [vmem:[%s1 + $0x8] sm:$0xff]
  %v46 = vld [vmem:[%s1 + $0x10] sm:$0xff]
  %v47 = vld [vmem:[%s1 + $0x18] sm:$0xff]
  %v48 = vld [vmem:[%s1 + $0x20] sm:$0xff]
  %v49 = vld [vmem:[%s1 + $0x28] sm:$0xff]
  %v50 = vld [vmem:[%s1 + $0x30] sm:$0xff]
  %v51 = vld [vmem:[%s1 + $0x38] sm:$0xff]
  %v52 = vld [vmem:[%s1 + $0x40] sm:$0xff]
  %v53 = vld [vmem:[%s1 + $0x48] sm:$0xff]
  %v54 = vld [vmem:[%s1 + $0x50] sm:$0xff]
  %v55 = vld [vmem:[%s1 + $0x58] sm:$0xff]
  %v56 = vld [vmem:[%s1 + $0x60] sm:$0xff]
  %v57 = vld [vmem:[%s1 + $0x68] sm:$0xff]
  %v58 = vld [vmem:[%s1 + $0x70] sm:$0xff]
  %v59 = vld [vmem:[%s1 + $0x78] sm:$0xff]
  %v60 = vld [vmem:[%s1 + $0x80] sm:$0xff]
  %v61 = vld [vmem:[%s1 + $0x88] sm:$0xff]
  %v62 = vld [vmem:[%s1 + $0x90] sm:$0xff]
  %v63 = vld [vmem:[%s1 + $0x98] sm:$0xff]
  %v64 = vld [vmem:[%s1 + $0xa0] sm:$0xff]
  %v65 = vld [vmem:[%s1 + $0xa8] sm:$0xff]
  %v66 = vld [vmem:[%s1 + $0xb0] sm:$0xff]
  %v67 = vld [vmem:[%s1 + $0xb8] sm:$0xff]
  %v68 = vld [vmem:[%s1 + $0xc0] sm:$0xff]
  %v69 = vld [vmem:[%s1 + $0xc8] sm:$0xff]
  %v70 = vld [vmem:[%s1 + $0xd0] sm:$0xff]
  %v71 = vld [vmem:[%s1 + $0xd8] sm:$0xff]
  %v72 = vld [vmem:[%s1 + $0xe0] sm:$0xff]
  %v73 = vld [vmem:[%s1 + $0xe8] sm:$0xff]
  %v74 = vld [vmem:[%s1 + $0xf0] sm:$0xff]
  %v75 = vld [vmem:[%s1 + $0xf8] sm:$0xff]
  %v76 = vld [vmem:[%s1 + $0x100] sm:$0xff]
  %v77 = vld [vmem:[%s1 + $0x108] sm:$0xff]
  %v78 = vld [vmem:[%s1 + $0x110] sm:$0xff]
  %v79 = vld [vmem:[%s1 + $0x118] sm:$0xff]
  %v80 = vld [vmem:[%s1 + $0x120] sm:$0xff]
  %v81 = vld [vmem:[%s1 + $0x128] sm:$0xff]
  %v82 = vld [vmem:[%s1 + $0x130] sm:$0xff]
  %v83 = vld [vmem:[%s1 + $0x138] sm:$0xff]
  %v84 = vld [vmem:[%s1 + $0x140] sm:$0xff]
  %v85 = vld [vmem:[%s1 + $0x148] sm:$0xff]
  %v86 = vld [vmem:[%s1 + $0x150] sm:$0xff]
  %v87 = vld [vmem:[%s1 + $0x158] sm:$0xff]
  %v88 = vld [vmem:[%s1 + $0x160] sm:$0xff]
  %v89 = vld [vmem:[%s1 + $0x168] sm:$0xff]
  %v90 = vld [vmem:[%s1 + $0x170] sm:$0xff]
  %v91 = vld [vmem:[%s1 + $0x178] sm:$0xff]
  %v92 = vld [vmem:[%s2] sm:$0x3]
  %v94 = vlaneseq
  %v95 = vshrl.u32 %v94, 7
  %v96 = vsub.s32 0, %v95
  %v97 = vrot.slane %v92, %v96
  %v98 = vlaneseq
  %v99 = vshrl.u32 %v98, 7
  %v100 = vsub.s32 1, %v99
  %v101 = vrot.slane %v92, %v100
  %v152 = vunpack.c.l.b16 %v44
  %v153 = vunpack.c.h.b16 %v44
  %v154 = vunpack.c.l.b16 %v45
  %v155 = vunpack.c.h.b16 %v45
  %v156 = vunpack.c.l.b16 %v46
  %v157 = vunpack.c.h.b16 %v46
  %v158 = vunpack.c.l.b16 %v47
  %v159 = vunpack.c.h.b16 %v47
  %v160 = vunpack.c.l.b16 %v48
  %v161 = vunpack.c.h.b16 %v48
  %v162 = vunpack.c.l.b16 %v49
  %v163 = vunpack.c.h.b16 %v49
  %v164 = vunpack.c.l.b16 %v50
  %v165 = vunpack.c.h.b16 %v50
  %v166 = vunpack.c.l.b16 %v51
  %v167 = vunpack.c.h.b16 %v51
  %v168 = vunpack.c.l.b16 %v52
  %v169 = vunpack.c.h.b16 %v52
  %v170 = vunpack.c.l.b16 %v53
  %v171 = vunpack.c.h.b16 %v53
  %v172 = vunpack.c.l.b16 %v54
  %v173 = vunpack.c.h.b16 %v54
  %v174 = vunpack.c.l.b16 %v55
  %v175 = vunpack.c.h.b16 %v55
  %v176 = vunpack.c.l.b16 %v56
  %v177 = vunpack.c.h.b16 %v56
  %v178 = vunpack.c.l.b16 %v57
  %v179 = vunpack.c.h.b16 %v57
  %v180 = vunpack.c.l.b16 %v58
  %v181 = vunpack.c.h.b16 %v58
  %v182 = vunpack.c.l.b16 %v59
  %v183 = vunpack.c.h.b16 %v59
  %v184 = vunpack.c.l.b16 %v60
  %v185 = vunpack.c.h.b16 %v60
  %v186 = vunpack.c.l.b16 %v61
  %v187 = vunpack.c.h.b16 %v61
  %v188 = vunpack.c.l.b16 %v62
  %v189 = vunpack.c.h.b16 %v62
  %v190 = vunpack.c.l.b16 %v63
  %v191 = vunpack.c.h.b16 %v63
  %v192 = vunpack.c.l.b16 %v64
  %v193 = vunpack.c.h.b16 %v64
  %v194 = vunpack.c.l.b16 %v65
  %v195 = vunpack.c.h.b16 %v65
  %v196 = vunpack.c.l.b16 %v66
  %v197 = vunpack.c.h.b16 %v66
  %v198 = vunpack.c.l.b16 %v67
  %v199 = vunpack.c.h.b16 %v67
  %v200 = vunpack.c.l.b16 %v68
  %v201 = vunpack.c.h.b16 %v68
  %v202 = vunpack.c.l.b16 %v69
  %v203 = vunpack.c.h.b16 %v69
  %v204 = vunpack.c.l.b16 %v70
  %v205 = vunpack.c.h.b16 %v70
  %v206 = vunpack.c.l.b16 %v71
  %v207 = vunpack.c.h.b16 %v71
  %v208 = vunpack.c.l.b16 %v72
  %v209 = vunpack.c.h.b16 %v72
  %v210 = vunpack.c.l.b16 %v73
  %v211 = vunpack.c.h.b16 %v73
  %v212 = vunpack.c.l.b16 %v74
  %v213 = vunpack.c.h.b16 %v74
  %v214 = vunpack.c.l.b16 %v75
  %v215 = vunpack.c.h.b16 %v75
  %v216 = vunpack.c.l.b16 %v76
  %v217 = vunpack.c.h.b16 %v76
  %v218 = vunpack.c.l.b16 %v77
  %v219 = vunpack.c.h.b16 %v77
  %v220 = vunpack.c.l.b16 %v78
  %v221 = vunpack.c.h.b16 %v78
  %v222 = vunpack.c.l.b16 %v79
  %v223 = vunpack.c.h.b16 %v79
  %v224 = vunpack.c.l.b16 %v80
  %v225 = vunpack.c.h.b16 %v80
  %v226 = vunpack.c.l.b16 %v81
  %v227 = vunpack.c.h.b16 %v81
  %v228 = vunpack.c.l.b16 %v82
  %v229 = vunpack.c.h.b16 %v82
  %v230 = vunpack.c.l.b16 %v83
  %v231 = vunpack.c.h.b16 %v83
  %v232 = vunpack.c.l.b16 %v84
  %v233 = vunpack.c.h.b16 %v84
  %v234 = vunpack.c.l.b16 %v85
  %v235 = vunpack.c.h.b16 %v85
  %v236 = vunpack.c.l.b16 %v86
  %v237 = vunpack.c.h.b16 %v86
  %v238 = vunpack.c.l.b16 %v87
  %v239 = vunpack.c.h.b16 %v87
  %v240 = vunpack.c.l.b16 %v88
  %v241 = vunpack.c.h.b16 %v88
  %v242 = vunpack.c.l.b16 %v89
  %v243 = vunpack.c.h.b16 %v89
  %v244 = vunpack.c.l.b16 %v90
  %v245 = vunpack.c.h.b16 %v90
  %v246 = vunpack.c.l.b16 %v91
  %v247 = vunpack.c.h.b16 %v91
  %v248 = vpack.c.b16 %v154, %v152
  %v249 = vpack.c.b16 %v155, %v153
  %v250 = vpack.c.b16 %v158, %v156
  %v251 = vpack.c.b16 %v159, %v157
  %v252 = vpack.c.b16 %v162, %v160
  %v253 = vpack.c.b16 %v163, %v161
  %v254 = vpack.c.b16 %v166, %v164
  %v255 = vpack.c.b16 %v167, %v165
  %v256 = vpack.c.b16 %v170, %v168
  %v257 = vpack.c.b16 %v171, %v169
  %v258 = vpack.c.b16 %v174, %v172
  %v259 = vpack.c.b16 %v175, %v173
  %v260 = vpack.c.b16 %v178, %v176
  %v261 = vpack.c.b16 %v179, %v177
  %v262 = vpack.c.b16 %v182, %v180
  %v263 = vpack.c.b16 %v183, %v181
  %v264 = vpack.c.b16 %v186, %v184
  %v265 = vpack.c.b16 %v187, %v185
  %v266 = vpack.c.b16 %v190, %v188
  %v267 = vpack.c.b16 %v191, %v189
  %v268 = vpack.c.b16 %v194, %v192
  %v269 = vpack.c.b16 %v195, %v193
  %v270 = vpack.c.b16 %v198, %v196
  %v271 = vpack.c.b16 %v199, %v197
  %v272 = vpack.c.b16 %v202, %v200
  %v273 = vpack.c.b16 %v203, %v201
  %v274 = vpack.c.b16 %v206, %v204
  %v275 = vpack.c.b16 %v207, %v205
  %v276 = vpack.c.b16 %v210, %v208
  %v277 = vpack.c.b16 %v211, %v209
  %v278 = vpack.c.b16 %v214, %v212
  %v279 = vpack.c.b16 %v215, %v213
  %v280 = vpack.c.b16 %v218, %v216
  %v281 = vpack.c.b16 %v219, %v217
  %v282 = vpack.c.b16 %v222, %v220
  %v283 = vpack.c.b16 %v223, %v221
  %v284 = vpack.c.b16 %v226, %v224
  %v285 = vpack.c.b16 %v227, %v225
  %v286 = vpack.c.b16 %v230, %v228
  %v287 = vpack.c.b16 %v231, %v229
  %v288 = vpack.c.b16 %v234, %v232
  %v289 = vpack.c.b16 %v235, %v233
  %v290 = vpack.c.b16 %v238, %v236
  %v291 = vpack.c.b16 %v239, %v237
  %v292 = vpack.c.b16 %v242, %v240
  %v293 = vpack.c.b16 %v243, %v241
  %v294 = vpack.c.b16 %v246, %v244
  %v295 = vpack.c.b16 %v247, %v245
  %344 = vmatprep.subr.bf16.mxu0 %v263
  %345 = vmatpush1.bf16.msra.mxu0 %v262
  %346 = vmatprep.subr.bf16.mxu0 %v261
  %347 = vmatpush1.bf16.msra.mxu0 %v260
  %348 = vmatprep.subr.bf16.mxu0 %v259
  %349 = vmatpush1.bf16.msra.mxu0 %v258
  %350 = vmatprep.subr.bf16.mxu0 %v257
  %351 = vmatpush1.bf16.msra.mxu0 %v256
  %352 = vmatprep.subr.bf16.mxu0 %v255
  %353 = vmatpush1.bf16.msra.mxu0 %v254
  %354 = vmatprep.subr.bf16.mxu0 %v253
  %355 = vmatpush1.bf16.msra.mxu0 %v252
  %356 = vmatprep.subr.bf16.mxu0 %v251
  %357 = vmatpush1.bf16.msra.mxu0 %v250
  %358 = vmatprep.subr.bf16.mxu0 %v249
  %359 = vmatpush1.bf16.msra.mxu0 %v248
  %360 = vmatprep.subr.bf16.mxu0 %v279
  %361 = vmatpush2.bf16.msra.mxu0 %v278
  %362 = vmatprep.subr.bf16.mxu0 %v277
  %363 = vmatpush2.bf16.msra.mxu0 %v276
  %364 = vmatprep.subr.bf16.mxu0 %v275
  %365 = vmatpush2.bf16.msra.mxu0 %v274
  %366 = vmatprep.subr.bf16.mxu0 %v273
  %367 = vmatpush2.bf16.msra.mxu0 %v272
  %368 = vmatprep.subr.bf16.mxu0 %v271
  %369 = vmatpush2.bf16.msra.mxu0 %v270
  %370 = vmatprep.subr.bf16.mxu0 %v269
  %371 = vmatpush2.bf16.msra.mxu0 %v268
  %372 = vmatprep.subr.bf16.mxu0 %v267
  %373 = vmatpush2.bf16.msra.mxu0 %v266
  %374 = vmatprep.subr.bf16.mxu0 %v265
  %375 = vmatpush2.bf16.msra.mxu0 %v264
  %376 = vmatprep.mubr.bf16.mxu0 %v42
  %377 = vmatmul.mubr.bf16.gmra.mxu0 %v41
  %v378 = vpop.f32.mrf.mxu0
  %v379 = vadd.f32 %v97, %v378
  %v380 = vpop.f32.mrf.mxu0
  %v381 = vadd.f32 %v101, %v380
  %v382 = vpop.f32.mrf.mxu0
  %v383 = vadd.f32 %v97, %v382
  %v384 = vpop.f32.mrf.mxu0
  %v385 = vadd.f32 %v101, %v384
  %386 = vdwg.mxu0
  %387 = vmatprep.subr.bf16.mxu0 %v295
  %388 = vmatpush1.bf16.msra.mxu0 %v294
  %389 = vmatprep.subr.bf16.mxu0 %v293
  %390 = vmatpush1.bf16.msra.mxu0 %v292
  %391 = vmatprep.subr.bf16.mxu0 %v291
  %392 = vmatpush1.bf16.msra.mxu0 %v290
  %393 = vmatprep.subr.bf16.mxu0 %v289
  %394 = vmatpush1.bf16.msra.mxu0 %v288
  %395 = vmatprep.subr.bf16.mxu0 %v287
  %396 = vmatpush1.bf16.msra.mxu0 %v286
  %397 = vmatprep.subr.bf16.mxu0 %v285
  %398 = vmatpush1.bf16.msra.mxu0 %v284
  %399 = vmatprep.subr.bf16.mxu0 %v283
  %400 = vmatpush1.bf16.msra.mxu0 %v282
  %401 = vmatprep.subr.bf16.mxu0 %v281
  %402 = vmatpush1.bf16.msra.mxu0 %v280
  %403 = vmatprep.subr.bf16.mxu0 0
  %404 = vmatpush2.bf16.msra.mxu0 0
  %405 = vmatprep.subr.bf16.mxu0 0
  %406 = vmatpush2.bf16.msra.mxu0 0
  %407 = vmatprep.subr.bf16.mxu0 0
  %408 = vmatpush2.bf16.msra.mxu0 0
  %409 = vmatprep.subr.bf16.mxu0 0
  %410 = vmatpush2.bf16.msra.mxu0 0
  %411 = vmatprep.subr.bf16.mxu0 0
  %412 = vmatpush2.bf16.msra.mxu0 0
  %413 = vmatprep.subr.bf16.mxu0 0
  %414 = vmatpush2.bf16.msra.mxu0 0
  %415 = vmatprep.subr.bf16.mxu0 0
  %416 = vmatpush2.bf16.msra.mxu0 0
  %417 = vmatprep.subr.bf16.mxu0 0
  %418 = vmatpush2.bf16.msra.mxu0 0
  %419 = vmatprep.mubr.bf16.mxu0 0
  %420 = vmatmul.mubr.bf16.gmra.mxu0 %v43
  %v421 = vpop.f32.mrf.mxu0
  %v422 = vadd.f32 %v379, %v421
  %v423 = vpop.f32.mrf.mxu0
  %v424 = vadd.f32 %v381, %v423
  %v425 = vpop.f32.mrf.mxu0
  %v426 = vadd.f32 %v383, %v425
  %v427 = vpop.f32.mrf.mxu0
  %v428 = vadd.f32 %v385, %v427
  %429 = vdwg.mxu0
  %v430 = vmax.f32 %v422, 0.0
  %v431 = vmax.f32 %v424, 0.0
  %v432 = vmax.f32 %v426, 0.0
  %v433 = vmax.f32 %v428, 0.0
  %v434 = vpack.c.bf16 %v432, %v430
  %v435 = vpack.c.bf16 %v433, %v431
  %v436 = vld [vmem:[%s3] sm:$0xf]
  %v437 = vld [vmem:[%s3 + $0x4] sm:$0xf]
  %v438 = vld [vmem:[%s3 + $0x8] sm:$0xf]
  %v439 = vld [vmem:[%s3 + $0xc] sm:$0xf]
  %v440 = vld [vmem:[%s3 + $0x10] sm:$0xf]
  %v441 = vld [vmem:[%s3 + $0x14] sm:$0xf]
  %v442 = vld [vmem:[%s3 + $0x18] sm:$0xf]
  %v443 = vld [vmem:[%s3 + $0x1c] sm:$0xf]
  %v444 = vld [vmem:[%s3 + $0x20] sm:$0xf]
  %v445 = vld [vmem:[%s3 + $0x24] sm:$0xf]
  %v446 = vld [vmem:[%s3 + $0x28] sm:$0xf]
  %v447 = vld [vmem:[%s3 + $0x2c] sm:$0xf]
  %v448 = vld [vmem:[%s3 + $0x30] sm:$0xf]
  %v449 = vld [vmem:[%s3 + $0x34] sm:$0xf]
  %v450 = vld [vmem:[%s3 + $0x38] sm:$0xf]
  %v451 = vld [vmem:[%s3 + $0x3c] sm:$0xf]
  %v452 = vld [vmem:[%s3 + $0x40] sm:$0xf]
  %v453 = vld [vmem:[%s3 + $0x44] sm:$0xf]
  %v454 = vld [vmem:[%s3 + $0x48] sm:$0xf]
  %v455 = vld [vmem:[%s3 + $0x4c] sm:$0xf]
  %v456 = vld [vmem:[%s3 + $0x50] sm:$0xf]
  %v457 = vld [vmem:[%s3 + $0x54] sm:$0xf]
  %v458 = vld [vmem:[%s3 + $0x58] sm:$0xf]
  %v459 = vld [vmem:[%s3 + $0x5c] sm:$0xf]
  %v460 = vld [vmem:[%s3 + $0x60] sm:$0xf]
  %v461 = vld [vmem:[%s3 + $0x64] sm:$0xf]
  %v462 = vld [vmem:[%s3 + $0x68] sm:$0xf]
  %v463 = vld [vmem:[%s3 + $0x6c] sm:$0xf]
  %v464 = vld [vmem:[%s3 + $0x70] sm:$0xf]
  %v465 = vld [vmem:[%s3 + $0x74] sm:$0xf]
  %v466 = vld [vmem:[%s3 + $0x78] sm:$0xf]
  %v467 = vld [vmem:[%s3 + $0x7c] sm:$0xf]
  %v468 = vld [vmem:[%s4] sm:$0x1]
  %v470 = vlaneseq
  %v471 = vshrl.u32 %v470, 7
  %v472 = vsub.s32 0, %v471
  %v473 = vrot.slane %v468, %v472
  %v507 = vunpack.c.l.b16 %v436
  %v508 = vunpack.c.l.b16 %v437
  %v509 = vunpack.c.l.b16 %v438
  %v510 = vunpack.c.l.b16 %v439
  %v511 = vunpack.c.l.b16 %v440
  %v512 = vunpack.c.l.b16 %v441
  %v513 = vunpack.c.l.b16 %v442
  %v514 = vunpack.c.l.b16 %v443
  %v515 = vunpack.c.l.b16 %v444
  %v516 = vunpack.c.l.b16 %v445
  %v517 = vunpack.c.l.b16 %v446
  %v518 = vunpack.c.l.b16 %v447
  %v519 = vunpack.c.l.b16 %v448
  %v520 = vunpack.c.l.b16 %v449
  %v521 = vunpack.c.l.b16 %v450
  %v522 = vunpack.c.l.b16 %v451
  %v523 = vunpack.c.l.b16 %v452
  %v524 = vunpack.c.l.b16 %v453
  %v525 = vunpack.c.l.b16 %v454
  %v526 = vunpack.c.l.b16 %v455
  %v527 = vunpack.c.l.b16 %v456
  %v528 = vunpack.c.l.b16 %v457
  %v529 = vunpack.c.l.b16 %v458
  %v530 = vunpack.c.l.b16 %v459
  %v531 = vunpack.c.l.b16 %v460
  %v532 = vunpack.c.l.b16 %v461
  %v533 = vunpack.c.l.b16 %v462
  %v534 = vunpack.c.l.b16 %v463
  %v535 = vunpack.c.l.b16 %v464
  %v536 = vunpack.c.l.b16 %v465
  %v537 = vunpack.c.l.b16 %v466
  %v538 = vunpack.c.l.b16 %v467
  %v539 = vpack.c.b16 %v508, %v507
  %v540 = vpack.c.b16 %v510, %v509
  %v541 = vpack.c.b16 %v512, %v511
  %v542 = vpack.c.b16 %v514, %v513
  %v543 = vpack.c.b16 %v516, %v515
  %v544 = vpack.c.b16 %v518, %v517
  %v545 = vpack.c.b16 %v520, %v519
  %v546 = vpack.c.b16 %v522, %v521
  %v547 = vpack.c.b16 %v524, %v523
  %v548 = vpack.c.b16 %v526, %v525
  %v549 = vpack.c.b16 %v528, %v527
  %v550 = vpack.c.b16 %v530, %v529
  %v551 = vpack.c.b16 %v532, %v531
  %v552 = vpack.c.b16 %v534, %v533
  %v553 = vpack.c.b16 %v536, %v535
  %v554 = vpack.c.b16 %v538, %v537
  %571 = vmatprep.subr.bf16.mxu0 0
  %572 = vmatpush1.bf16.msra.mxu0 %v546
  %573 = vmatprep.subr.bf16.mxu0 0
  %574 = vmatpush1.bf16.msra.mxu0 %v545
  %575 = vmatprep.subr.bf16.mxu0 0
  %576 = vmatpush1.bf16.msra.mxu0 %v544
  %577 = vmatprep.subr.bf16.mxu0 0
  %578 = vmatpush1.bf16.msra.mxu0 %v543
  %579 = vmatprep.subr.bf16.mxu0 0
  %580 = vmatpush1.bf16.msra.mxu0 %v542
  %581 = vmatprep.subr.bf16.mxu0 0
  %582 = vmatpush1.bf16.msra.mxu0 %v541
  %583 = vmatprep.subr.bf16.mxu0 0
  %584 = vmatpush1.bf16.msra.mxu0 %v540
  %585 = vmatprep.subr.bf16.mxu0 0
  %586 = vmatpush1.bf16.msra.mxu0 %v539
  %587 = vmatprep.subr.bf16.mxu0 0
  %588 = vmatpush2.bf16.msra.mxu0 %v554
  %589 = vmatprep.subr.bf16.mxu0 0
  %590 = vmatpush2.bf16.msra.mxu0 %v553
  %591 = vmatprep.subr.bf16.mxu0 0
  %592 = vmatpush2.bf16.msra.mxu0 %v552
  %593 = vmatprep.subr.bf16.mxu0 0
  %594 = vmatpush2.bf16.msra.mxu0 %v551
  %595 = vmatprep.subr.bf16.mxu0 0
  %596 = vmatpush2.bf16.msra.mxu0 %v550
  %597 = vmatprep.subr.bf16.mxu0 0
  %598 = vmatpush2.bf16.msra.mxu0 %v549
  %599 = vmatprep.subr.bf16.mxu0 0
  %600 = vmatpush2.bf16.msra.mxu0 %v548
  %601 = vmatprep.subr.bf16.mxu0 0
  %602 = vmatpush2.bf16.msra.mxu0 %v547
  %603 = vmatprep.mubr.bf16.mxu0 %v435
  %604 = vmatmul.mubr.bf16.gmra.mxu0 %v434
  %v605 = vpop.f32.mrf.mxu0
  %v606 = vadd.f32 %v473, %v605
  %v607 = vpop.f32.mrf.mxu0
  %v608 = vpop.f32.mrf.mxu0
  %v609 = vadd.f32 %v473, %v608
  %v610 = vpop.f32.mrf.mxu0
  %611 = vdwg.mxu0
  %v612 = vmax.f32 %v606, 0.0
  %v613 = vmax.f32 %v609, 0.0
  %v614 = vpack.c.bf16 %v613, %v612
  %v615 = vld [vmem:[%s5] sm:$0xf]
  %v616 = vld [vmem:[%s5 + $0x4] sm:$0xf]
  %v617 = vld [vmem:[%s5 + $0x8] sm:$0xf]
  %v618 = vld [vmem:[%s5 + $0xc] sm:$0xf]
  %v619 = vld [vmem:[%s5 + $0x10] sm:$0xf]
  %v620 = vld [vmem:[%s5 + $0x14] sm:$0xf]
  %v621 = vld [vmem:[%s5 + $0x18] sm:$0xf]
  %v622 = vld [vmem:[%s5 + $0x1c] sm:$0xf]
  %v623 = vld [vmem:[%s5 + $0x20] sm:$0xf]
  %v624 = vld [vmem:[%s5 + $0x24] sm:$0xf]
  %v625 = vld [vmem:[%s5 + $0x28] sm:$0xf]
  %v626 = vld [vmem:[%s5 + $0x2c] sm:$0xf]
  %v627 = vld [vmem:[%s5 + $0x30] sm:$0xf]
  %v628 = vld [vmem:[%s5 + $0x34] sm:$0xf]
  %v629 = vld [vmem:[%s5 + $0x38] sm:$0xf]
  %v630 = vld [vmem:[%s5 + $0x3c] sm:$0xf]
  %v631 = vld [vmem:[%s6] sm:$0x1]
  %v633 = vlaneseq
  %v634 = vshrl.u32 %v633, 7
  %v635 = vsub.s32 0, %v634
  %v636 = vrot.slane %v631, %v635
  %v654 = vunpack.c.l.b16 %v615
  %v655 = vunpack.c.l.b16 %v616
  %v656 = vunpack.c.l.b16 %v617
  %v657 = vunpack.c.l.b16 %v618
  %v658 = vunpack.c.l.b16 %v619
  %v659 = vunpack.c.l.b16 %v620
  %v660 = vunpack.c.l.b16 %v621
  %v661 = vunpack.c.l.b16 %v622
  %v662 = vunpack.c.l.b16 %v623
  %v663 = vunpack.c.l.b16 %v624
  %v664 = vunpack.c.l.b16 %v625
  %v665 = vunpack.c.l.b16 %v626
  %v666 = vunpack.c.l.b16 %v627
  %v667 = vunpack.c.l.b16 %v628
  %v668 = vunpack.c.l.b16 %v629
  %v669 = vunpack.c.l.b16 %v630
  %v670 = vpack.c.b16 %v655, %v654
  %v671 = vpack.c.b16 %v657, %v656
  %v672 = vpack.c.b16 %v659, %v658
  %v673 = vpack.c.b16 %v661, %v660
  %v674 = vpack.c.b16 %v663, %v662
  %v675 = vpack.c.b16 %v665, %v664
  %v676 = vpack.c.b16 %v667, %v666
  %v677 = vpack.c.b16 %v669, %v668
  %686 = vmatprep.subr.bf16.mxu0 0
  %687 = vmatpush1.bf16.msra.mxu0 %v677
  %688 = vmatprep.subr.bf16.mxu0 0
  %689 = vmatpush1.bf16.msra.mxu0 %v676
  %690 = vmatprep.subr.bf16.mxu0 0
  %691 = vmatpush1.bf16.msra.mxu0 %v675
  %692 = vmatprep.subr.bf16.mxu0 0
  %693 = vmatpush1.bf16.msra.mxu0 %v674
  %694 = vmatprep.subr.bf16.mxu0 0
  %695 = vmatpush1.bf16.msra.mxu0 %v673
  %696 = vmatprep.subr.bf16.mxu0 0
  %697 = vmatpush1.bf16.msra.mxu0 %v672
  %698 = vmatprep.subr.bf16.mxu0 0
  %699 = vmatpush1.bf16.msra.mxu0 %v671
  %700 = vmatprep.subr.bf16.mxu0 0
  %701 = vmatpush1.bf16.msra.mxu0 %v670
  %702 = vmatprep.subr.bf16.mxu0 0
  %703 = vmatpush2.bf16.msra.mxu0 0
  %704 = vmatprep.subr.bf16.mxu0 0
  %705 = vmatpush2.bf16.msra.mxu0 0
  %706 = vmatprep.subr.bf16.mxu0 0
  %707 = vmatpush2.bf16.msra.mxu0 0
  %708 = vmatprep.subr.bf16.mxu0 0
  %709 = vmatpush2.bf16.msra.mxu0 0
  %710 = vmatprep.subr.bf16.mxu0 0
  %711 = vmatpush2.bf16.msra.mxu0 0
  %712 = vmatprep.subr.bf16.mxu0 0
  %713 = vmatpush2.bf16.msra.mxu0 0
  %714 = vmatprep.subr.bf16.mxu0 0
  %715 = vmatpush2.bf16.msra.mxu0 0
  %716 = vmatprep.subr.bf16.mxu0 0
  %717 = vmatpush2.bf16.msra.mxu0 0
  %718 = vmatprep.mubr.bf16.mxu0 0
  %719 = vmatmul.mubr.bf16.gmra.mxu0 %v614
  %v720 = vpop.f32.mrf.mxu0
  %v721 = vadd.f32 %v636, %v720
  %v722 = vpop.f32.mrf.mxu0
  %v723 = vpop.f32.mrf.mxu0
  %v724 = vadd.f32 %v636, %v723
  %v725 = vpop.f32.mrf.mxu0
  %726 = vdwg.mxu0
  %v727 = vmax.f32 %v721, 0.0
  %v728 = vmax.f32 %v724, 0.0
  %v729 = vld [vmem:[%s7] sm:$0x1]
  %v730 = vld [vmem:[#allocation2] sm:$0x1]
  %732 = vset.pattern.permute.xlu0 0
  %733 = vperm.xlu0 %732, %v730
  %v734 = vpop.permute.xlu0 %733
  %v736 = vlaneseq
  %v737 = vshrl.u32 %v736, 7
  %v738 = vsub.s32 0, %v737
  %v739 = vrot.slane %v734, %v738
  %vm740 = vcmask 523264
  %v742 = vsel %vm740, %v729, 0
  %v745 = vsel %vm740, %v727, 0
  %v748 = vsel %vm740, %v728, 0
  %750 = vmatprep.subr.mxu0 0.0
  %751 = vmatpush1.xpose.msra.mxu0 0.0
  %752 = vmatprep.subr.mxu0 0.0
  %753 = vmatpush1.xpose.msra.mxu0 0.0
  %754 = vmatprep.subr.mxu0 0.0
  %755 = vmatpush1.xpose.msra.mxu0 0.0
  %756 = vmatprep.subr.mxu0 0.0
  %757 = vmatpush1.xpose.msra.mxu0 0.0
  %758 = vmatprep.subr.mxu0 0.0
  %759 = vmatpush1.xpose.msra.mxu0 0.0
  %760 = vmatprep.subr.mxu0 0.0
  %761 = vmatpush1.xpose.msra.mxu0 0.0
  %762 = vmatprep.subr.mxu0 0.0
  %763 = vmatpush1.xpose.msra.mxu0 0.0
  %764 = vmatprep.subr.mxu0 0.0
  %765 = vmatpush1.xpose.msra.mxu0 0.0
  %766 = vmatprep.subr.mxu0 0.0
  %767 = vmatpush1.xpose.msra.mxu0 0.0
  %768 = vmatprep.subr.mxu0 0.0
  %769 = vmatpush1.xpose.msra.mxu0 0.0
  %770 = vmatprep.subr.mxu0 0.0
  %771 = vmatpush1.xpose.msra.mxu0 0.0
  %772 = vmatprep.subr.mxu0 0.0
  %773 = vmatpush1.xpose.msra.mxu0 0.0
  %774 = vmatprep.subr.mxu0 0.0
  %775 = vmatpush1.xpose.msra.mxu0 0.0
  %776 = vmatprep.subr.mxu0 0.0
  %777 = vmatpush1.xpose.msra.mxu0 0.0
  %778 = vmatprep.subr.mxu0 0.0
  %779 = vmatpush1.xpose.msra.mxu0 %v748
  %780 = vmatprep.subr.mxu0 0.0
  %781 = vmatpush1.xpose.msra.mxu0 %v745
  %782 = vmatprep.subr.mxu0 0.0
  %783 = vmatpush2.xpose.msra.mxu0 0.0
  %784 = vmatprep.subr.mxu0 0.0
  %785 = vmatpush2.xpose.msra.mxu0 0.0
  %786 = vmatprep.subr.mxu0 0.0
  %787 = vmatpush2.xpose.msra.mxu0 0.0
  %788 = vmatprep.subr.mxu0 0.0
  %789 = vmatpush2.xpose.msra.mxu0 0.0
  %790 = vmatprep.subr.mxu0 0.0
  %791 = vmatpush2.xpose.msra.mxu0 0.0
  %792 = vmatprep.subr.mxu0 0.0
  %793 = vmatpush2.xpose.msra.mxu0 0.0
  %794 = vmatprep.subr.mxu0 0.0
  %795 = vmatpush2.xpose.msra.mxu0 0.0
  %796 = vmatprep.subr.mxu0 0.0
  %797 = vmatpush2.xpose.msra.mxu0 0.0
  %798 = vmatprep.subr.mxu0 0.0
  %799 = vmatpush2.xpose.msra.mxu0 0.0
  %800 = vmatprep.subr.mxu0 0.0
  %801 = vmatpush2.xpose.msra.mxu0 0.0
  %802 = vmatprep.subr.mxu0 0.0
  %803 = vmatpush2.xpose.msra.mxu0 0.0
  %804 = vmatprep.subr.mxu0 0.0
  %805 = vmatpush2.xpose.msra.mxu0 0.0
  %806 = vmatprep.subr.mxu0 0.0
  %807 = vmatpush2.xpose.msra.mxu0 0.0
  %808 = vmatprep.subr.mxu0 0.0
  %809 = vmatpush2.xpose.msra.mxu0 0.0
  %810 = vmatprep.subr.mxu0 0.0
  %811 = vmatpush2.xpose.msra.mxu0 0.0
  %812 = vmatprep.subr.mxu0 0.0
  %813 = vmatpush2.xpose.msra.mxu0 0.0
  %814 = vmatprep.mubr.f32.mxu0 0.0
  %815 = vmatmul.mubr.f32.gmra.mxu0 %v742
  %v816 = vpop.f32.mrf.mxu0
  %v817 = vadd.f32 %v739, %v816
  %v818 = vpop.f32.mrf.mxu0
  %819 = vdwg.mxu0
  %v820 = vmax.f32 %v817, 0.0
  %vm821 = vcmask 122880
  %822 = vst.msk [vmem:[%s9] sm:$0x1] %vm821, %v820
  // Predicated region
  $region38: #{generator_forward.1} parent=0 // pred_check
    _
  $region39: #{generator_forward.1} parent=0 // pred_check_branch
    %824 = sbr.rel (0) target = $region41
  $region40: #{generator_forward.1} parent=0 // pred_region
    _
  $region41: #{generator_forward.1} parent=0 // pred_fallthru
    _
  // Predicated region
  $region42: #{generator_forward.1} parent=0 // pred_check
    _
  $region43: #{generator_forward.1} parent=0 // pred_check_branch
    %826 = sbr.rel (0) target = $region45
  $region44: #{generator_forward.1} parent=0 // pred_region
    _
  $region45: #{generator_forward.1} parent=0 // pred_fallthru
    _

</llo_original>
